<compile_context>
chip_gen: v6e
topology: v6e:2x2x1
jax: 0.10.0
libtpu: 0.0.40
codegen_flags: <defaults>
</compile_context>

<pallas_src>
import jax
import jax.numpy as jnp
from jax.experimental import pallas as pl
from jax.experimental.pallas import tpu as pltpu

# --- small synthetic sizes consistent with the module structure ---
N_STATES = 256            # stand-in for 57600
N_ACTIONS = 8             # stand-in for env.action_space.n
D_IN = N_STATES * 2       # 512  (real: 115200)
HIDDEN = 256
BATCH = 8                 # raising BATCH amortizes the w1 stream (biggest algorithmic lever)

LANE = 128                # TPU lane width


# --------------------------------------------------------------------------------------
# Kernels
# --------------------------------------------------------------------------------------
def layer1_kernel(x_ref, w1_ref, b1_ref, h1_ref, acc_ref):
    """Layer 1: h1 = relu(x @ w1 + b1), K-tiled, hidden-column-blocked.

    Grid: (j, k) = (hidden column block  [parallel, split across TCs on v7x],
                    D_IN reduction tile  [arbitrary, resident f32 accumulator]).
    """
    k = pl.program_id(1)

    @pl.when(k == 0)
    def _init():
        acc_ref[...] = jnp.zeros_like(acc_ref)

    # bf16 MXU operands (x cast in-register), f32 accumulation.
    acc_ref[...] += jnp.dot(x_ref[...].astype(jnp.bfloat16), w1_ref[...],
                            preferred_element_type=jnp.float32)

    @pl.when(k == pl.num_programs(1) - 1)
    def _finalize():
        h1_ref[...] = jnp.maximum(acc_ref[...] + b1_ref[...], 0.0).astype(h1_ref.dtype)


def epilogue_kernel(h1_ref, w2_ref, b2_ref, w3_ref, b3_ref, o_ref):
    """Layers 2/3: relu(h1 @ w2 + b2) @ w3 + b3 (w3/b3 lane-padded to 128)."""
    h2 = jnp.dot(h1_ref[...], w2_ref[...], preferred_element_type=jnp.float32) + b2_ref[...]
    h2 = jnp.maximum(h2, 0.0)
    out = jnp.dot(h2.astype(jnp.bfloat16), w3_ref[...],
                  preferred_element_type=jnp.float32) + b3_ref[...]
    o_ref[...] = out.astype(o_ref.dtype)


# --------------------------------------------------------------------------------------
# One-time parameter preparation (cast / pad ONCE, not per call)
# --------------------------------------------------------------------------------------
def prepare_params(w1, b1, w2, b2, w3, b3):
    """Cast weights to bf16 and lane-pad w3/b3 once. Biases stay f32."""
    hidden = w1.shape[1]
    n_act = w3.shape[1]
    a_pad = max(LANE, pl.cdiv(n_act, LANE) * LANE)

    w3p = jnp.zeros((hidden, a_pad), jnp.bfloat16).at[:, :n_act].set(w3.astype(jnp.bfloat16))
    b3p = jnp.zeros((1, a_pad), jnp.float32).at[:, :n_act].set(
        b3.reshape(1, -1).astype(jnp.float32))

    return {
        "w1": w1.astype(jnp.bfloat16),
        "b1": b1.reshape(1, -1).astype(jnp.float32),
        "w2": w2.astype(jnp.bfloat16),
        "b2": b2.reshape(1, -1).astype(jnp.float32),
        "w3p": w3p,
        "b3p": b3p,
        "n_actions": int(n_act),
    }


def _pick_tk(d_in, target):
    """Largest multiple-of-128 divisor of d_in that is <= target (no per-call padding)."""
    if d_in % LANE != 0:
        return d_in                      # single full-K step; block == full dim, still legal
    target = max(LANE, min(int(target), d_in))
    best = LANE
    t = LANE
    while t <= target:
        if d_in % t == 0:
            best = t
        t += LANE
    return best


# --------------------------------------------------------------------------------------
# Forward wrapper
# --------------------------------------------------------------------------------------
def net_forward(x, params, *, tk=7680):
    """Net.forward: Linear(D_IN,256)->ReLU->Linear(256,256)->ReLU->Linear(256,N_ACTIONS).

    Weights are stored (in, out) so x @ W matches PyTorch's x @ W.T + b.
    x may be f32 (cast to bf16 in-register) or already bf16.
    """
    w1, b1 = params["w1"], params["b1"]
    w2, b2 = params["w2"], params["b2"]
    w3p, b3p = params["w3p"], params["b3p"]
    n_act = params["n_actions"]

    B, d_in = x.shape
    hidden = w1.shape[1]
    a_pad = w3p.shape[1]

    # hidden column blocking (parallel axis -> both TCs on v7x)
    tn = LANE if (hidden % LANE == 0 and hidden > LANE) else hidden
    nh = hidden // tn

    # K tiling of the layer-1 reduction (dominant HBM traffic), exact divisor -> no padding
    tk = _pick_tk(d_in, tk)
    nk = d_in // tk

    x_elt = x.dtype.itemsize

    # ---- kernel 1: layer 1 (streaming-bound on w1) ----
    tile_bytes = 2 * (B * tk * x_elt          # x tile, double-buffered
                      + tk * tn * 2           # w1 tile (bf16), double-buffered
                      + tn * 4                # b1 block
                      + B * tn * 2)           # h1 output block (bf16)
    scratch_bytes = B * tn * 4
    vmem1 = int(min(48 << 20, max(8 << 20, tile_bytes + scratch_bytes + (2 << 20))))

    cost1 = pl.CostEstimate(
        flops=2 * B * d_in * hidden,
        transcendentals=0,
        bytes_accessed=(nh * B * d_in * x_elt + d_in * hidden * 2
                        + hidden * 4 + B * hidden * 2),
    )

    h1 = pl.pallas_call(
        layer1_kernel,
        out_shape=jax.ShapeDtypeStruct((B, hidden), jnp.bfloat16),
        grid_spec=pltpu.PrefetchScalarGridSpec(
            num_scalar_prefetch=0,
            grid=(nh, nk),
            in_specs=[
                pl.BlockSpec((B, tk), lambda j, k: (0, k)),    # x  (streamed over K)
                pl.BlockSpec((tk, tn), lambda j, k: (k, j)),   # w1 (streamed over K, col block j)
                pl.BlockSpec((1, tn), lambda j, k: (0, j)),    # b1 (per column block)
            ],
            out_specs=pl.BlockSpec((B, tn), lambda j, k: (0, j)),   # h1 column block (resident over K)
            scratch_shapes=[pltpu.VMEM((B, tn), jnp.float32)],      # per-core f32 accumulator
        ),
        compiler_params=pltpu.CompilerParams(
            dimension_semantics=("parallel", "arbitrary"),   # col blocks parallel, K is a reduction
            vmem_limit_bytes=vmem1,
        ),
        cost_estimate=cost1,
    )(x, w1, b1)

    # ---- kernel 2: tiny layers 2/3 epilogue (single step) ----
    cost2 = pl.CostEstimate(
        flops=2 * B * (hidden * hidden + hidden * a_pad),
        transcendentals=0,
        bytes_accessed=(B * hidden * 2 + hidden * hidden * 2 + hidden * a_pad * 2
                        + (hidden + a_pad) * 4 + B * a_pad * 4),
    )

    out_padded = pl.pallas_call(
        epilogue_kernel,
        out_shape=jax.ShapeDtypeStruct((B, a_pad), jnp.float32),
        grid_spec=pltpu.PrefetchScalarGridSpec(
            num_scalar_prefetch=0,
            grid=(1,),
            in_specs=[
                pl.BlockSpec((B, hidden), lambda i: (0, 0)),        # h1
                pl.BlockSpec((hidden, hidden), lambda i: (0, 0)),   # w2
                pl.BlockSpec((1, hidden), lambda i: (0, 0)),        # b2
                pl.BlockSpec((hidden, a_pad), lambda i: (0, 0)),    # w3 (lane-padded)
                pl.BlockSpec((1, a_pad), lambda i: (0, 0)),         # b3 (lane-padded)
            ],
            out_specs=pl.BlockSpec((B, a_pad), lambda i: (0, 0)),
        ),
        compiler_params=pltpu.CompilerParams(
            dimension_semantics=("arbitrary",),
        ),
        cost_estimate=cost2,
    )(h1, w2, b2, w3p, b3p)

    # slice the lane padding back off
    return out_padded[:, :n_act]


# --------------------------------------------------------------------------------------
# Deterministic init (PyTorch-Linear-style uniform bounds), then one-time prepare.
# --------------------------------------------------------------------------------------
def init_params(key):
    ks = jax.random.split(key, 6)

    def lin(kw, kb, d_in, d_out):
        bound = 1.0 / jnp.sqrt(jnp.float32(d_in))
        w = jax.random.uniform(kw, (d_in, d_out), jnp.float32, -bound, bound)
        b = jax.random.uniform(kb, (1, d_out), jnp.float32, -bound, bound)
        return w, b

    w1, b1 = lin(ks[0], ks[1], D_IN, HIDDEN)
    w2, b2 = lin(ks[2], ks[3], HIDDEN, HIDDEN)
    w3, b3 = lin(ks[4], ks[5], HIDDEN, N_ACTIONS)
    return w1, b1, w2, b2, w3, b3


if __name__ == "__main__":
    key = jax.random.PRNGKey(0)
    k_x, k_p = jax.random.split(key)

    x = jax.random.normal(k_x, (BATCH, D_IN), jnp.float32)
    w1, b1, w2, b2, w3, b3 = init_params(k_p)

    # one-time cast/pad (this is the "store weights bf16 persistently" step)
    params = prepare_params(w1, b1, w2, b2, w3, b3)

    # small tk so the toy shapes exercise the multi-step K pipeline (grid = (2, 4) here)
    out = net_forward(x, params, tk=128)
    out = jax.block_until_ready(out)
    assert out.shape == (BATCH, N_ACTIONS)

    # reference with the same bf16 operand rounding (tight check of kernel logic)
    def q(a):
        return a.astype(jnp.bfloat16).astype(jnp.float32)

    h1r = jnp.maximum(q(x) @ q(w1) + b1, 0.0)
    h2r = jnp.maximum(q(h1r) @ q(w2) + b2, 0.0)
    ref_bf16 = q(h2r) @ q(w3) + b3
    assert jnp.allclose(out, ref_bf16, atol=2e-3, rtol=2e-3)

    # loose sanity check against the pure-f32 PyTorch-equivalent forward
    h1f = jnp.maximum(x @ w1 + b1, 0.0)
    h2f = jnp.maximum(h1f @ w2 + b2, 0.0)
    ref_f32 = h2f @ w3 + b3
    assert jnp.allclose(out, ref_f32, atol=5e-2, rtol=5e-2)

    print("KERNEL_OK")
</pallas_src>

<mosaic_0001>
module attributes {stable_mosaic.version = 11 : i64} {
  func.func @layer1_kernel(%arg0: i32, %arg1: i32, %arg2: memref<8x128xf32, #tpu.memory_space<vmem>>, %arg3: memref<128x128xbf16, #tpu.memory_space<vmem>>, %arg4: memref<1x128xf32, #tpu.memory_space<vmem>>, %arg5: memref<8x128xbf16, #tpu.memory_space<vmem>>, %arg6: memref<8x128xf32, #tpu.memory_space<vmem>>) attributes {dimension_semantics = [#tpu.dimension_semantics<parallel>, #tpu.dimension_semantics<arbitrary>], iteration_bounds = array<i64: 2, 4>, scalar_prefetch = 0 : i64, scratch_operands = 1 : i64, tpu.core_type = #tpu.core_type<tc>, window_params = [{transform_indices = @transform_0, window_bounds = array<i64: 8, 128>}, {transform_indices = @transform_1, window_bounds = array<i64: 128, 128>}, {transform_indices = @transform_2, window_bounds = array<i64: 1, 128>}, {transform_indices = @transform_3, window_bounds = array<i64: 8, 128>}]} {
    %c0_i32 = arith.constant 0 : i32
    %0 = arith.cmpi eq, %arg1, %c0_i32 : i32
    %1 = arith.extui %0 : i1 to i32
    %c0_i32_0 = arith.constant 0 : i32
    %2 = arith.cmpi ne, %1, %c0_i32_0 : i32
    scf.if %2 {
      %cst_9 = arith.constant 0.000000e+00 : f32
      %13 = vector.broadcast %cst_9 : f32 to vector<8x128xf32>
      %c0_10 = arith.constant 0 : index
      %c0_11 = arith.constant 0 : index
      %14 = vector.load %arg6[%c0_10, %c0_11] : memref<8x128xf32, #tpu.memory_space<vmem>>, vector<8x128xf32>
      tpu.vector_store %arg6[%c0_10, %c0_11], %13 {strides = array<i32>} : memref<8x128xf32, #tpu.memory_space<vmem>>, vector<8x128xf32>,
    } else {
    }
    %c0 = arith.constant 0 : index
    %c0_1 = arith.constant 0 : index
    %3 = vector.load %arg6[%c0, %c0_1] : memref<8x128xf32, #tpu.memory_space<vmem>>, vector<8x128xf32>
    %c0_2 = arith.constant 0 : index
    %c0_3 = arith.constant 0 : index
    %4 = vector.load %arg2[%c0_2, %c0_3] : memref<8x128xf32, #tpu.memory_space<vmem>>, vector<8x128xf32>
    %5 = arith.truncf %4 : vector<8x128xf32> to vector<8x128xbf16>
    %c0_4 = arith.constant 0 : index
    %c0_5 = arith.constant 0 : index
    %6 = vector.load %arg3[%c0_4, %c0_5] : memref<128x128xbf16, #tpu.memory_space<vmem>>, vector<128x128xbf16>
    %cst = arith.constant dense<0.000000e+00> : vector<8x128xf32>
    %7 = tpu.matmul %5, %6, %cst {dimension_numbers = #tpu.dot_dimension_numbers<[1], [0], [0], [1], [0, 0, 1, 1], [], []>} : vector<8x128xbf16>, vector<128x128xbf16>, vector<8x128xf32> -> vector<8x128xf32>
    %8 = arith.addf %3, %7 : vector<8x128xf32>
    %c0_6 = arith.constant 0 : index
    %c0_7 = arith.constant 0 : index
    %9 = vector.load %arg6[%c0_6, %c0_7] : memref<8x128xf32, #tpu.memory_space<vmem>>, vector<8x128xf32>
    tpu.vector_store %arg6[%c0_6, %c0_7], %8 {strides = array<i32>} : memref<8x128xf32, #tpu.memory_space<vmem>>, vector<8x128xf32>,
    %c3_i32 = arith.constant 3 : i32
    %10 = arith.cmpi eq, %arg1, %c3_i32 : i32
    %11 = arith.extui %10 : i1 to i32
    %c0_i32_8 = arith.constant 0 : i32
    %12 = arith.cmpi ne, %11, %c0_i32_8 : i32
    scf.if %12 {
      %c0_9 = arith.constant 0 : index
      %c0_10 = arith.constant 0 : index
      %13 = vector.load %arg6[%c0_9, %c0_10] : memref<8x128xf32, #tpu.memory_space<vmem>>, vector<8x128xf32>
      %c0_11 = arith.constant 0 : index
      %c0_12 = arith.constant 0 : index
      %14 = vector.load %arg4[%c0_11, %c0_12] : memref<1x128xf32, #tpu.memory_space<vmem>>, vector<1x128xf32>
      %15 = vector.broadcast %14 : vector<1x128xf32> to vector<8x128xf32>
      %16 = arith.addf %13, %15 : vector<8x128xf32>
      %cst_13 = arith.constant 0.000000e+00 : f32
      %17 = vector.broadcast %cst_13 : f32 to vector<8x128xf32>
      %18 = arith.maximumf %16, %17 : vector<8x128xf32>
      %19 = arith.truncf %18 : vector<8x128xf32> to vector<8x128xbf16>
      %c0_14 = arith.constant 0 : index
      %c0_15 = arith.constant 0 : index
      %20 = vector.load %arg5[%c0_14, %c0_15] : memref<8x128xbf16, #tpu.memory_space<vmem>>, vector<8x128xbf16>
      tpu.vector_store %arg5[%c0_14, %c0_15], %19 {strides = array<i32>} : memref<8x128xbf16, #tpu.memory_space<vmem>>, vector<8x128xbf16>,
    } else {
    }
    return
  }
  func.func @transform_0(%arg0: i32, %arg1: i32) -> (i32, i32) {
    %c0_i32 = arith.constant 0 : i32
    %c0_i32_0 = arith.constant 0 : i32
    return %c0_i32, %arg1 : i32, i32
  }
  func.func @transform_1(%arg0: i32, %arg1: i32) -> (i32, i32) {
    %c0_i32 = arith.constant 0 : i32
    return %arg1, %arg0 : i32, i32
  }
  func.func @transform_2(%arg0: i32, %arg1: i32) -> (i32, i32) {
    %c0_i32 = arith.constant 0 : i32
    %c0_i32_0 = arith.constant 0 : i32
    return %c0_i32, %arg0 : i32, i32
  }
  func.func @transform_3(%arg0: i32, %arg1: i32) -> (i32, i32) {
    %c0_i32 = arith.constant 0 : i32
    %c0_i32_0 = arith.constant 0 : i32
    return %c0_i32, %arg0 : i32, i32
  }
}

</mosaic_0001>

<llo_original>
// kernel: tpu_custom_call.1
$region0: #{tpu_custom_call.1}
  #allocation0 [shape = 'u32[]', space=smem, size = 0x4, offset = 0x4, fixed_abs, tag = 'smem constant byte address 0x4 - core index']
  #allocation1 [shape = 'u32[144,128]{1,0:T(1,128)}', space=vmem, size = 0x12000, scoped, tag = 'internal scratch']
  #allocation2 [shape = 'f32[8,128]{1,0:T(8,128)}', space=vmem, size = 0x1000, scoped, tag = 'scratch operand']
  %s0 = inlined_call_operand.hbm [shape: f32[8,512], index: 0, kind: input, shape index: {}]
  %s1 = inlined_call_operand.hbm [shape: bf16[512,256], index: 1, kind: input, shape index: {}]
  %s2 = inlined_call_operand.vmem [shape: f32[1,256], index: 2, kind: input, shape index: {}]
  %s3 = inlined_call_operand.hbm [shape: bf16[8,256], index: 3, kind: output, shape index: {}]
  %s4 = sld [smem:[#allocation0]]
  $region61: #{tpu_custom_call.1} parent=0
    _
  %s6 = ssub.s32 1, %s4
  %s7 = scalar_select 0, %s6, %s4
  $region1: #{tpu_custom_call.1} parent=0
    #allocation3 [shape = 'u8[8192]{0}', space=vmem, size = 0x2000, scoped, tag = 'input window, operand 0']
    #allocation4 [shape = 's32[2]{0}', space=sflag, size = 0x8, scoped, tag = 'scoped memory for tpu_custom_call.1']
    #allocation5 [shape = 's32[2]{0}', space=sflag, size = 0x8, scoped, tag = 'scoped memory for tpu_custom_call.1']
    #allocation6 [shape = 'u8[65536]{0}', space=vmem, size = 0x10000, scoped, tag = 'input window, operand 1']
    #allocation7 [shape = 's32[2]{0}', space=sflag, size = 0x8, scoped, tag = 'scoped memory for tpu_custom_call.1']
    #allocation8 [shape = 'u8[4096]{0}', space=vmem, size = 0x1000, scoped, tag = 'output window, operand 0']
    %8 = vsyncpa [#allocation4], 0
    %s9 = scalar_lea.sflag [#allocation4], 1
    %10 = vsyncpa %s9, 0
    %11 = vsyncpa [#allocation7], 0
    %s12 = scalar_lea.sflag [#allocation7], 1
    %13 = vsyncpa %s12, 0
    %14 = vsyncpa [#allocation5], 0
    %s15 = scalar_lea.sflag [#allocation5], 1
    %16 = vsyncpa %s15, 0
    loop: start=0, step=1, limit=10
    $region2: #{tpu_custom_call.1} parent=1 // loop_pre_header
      _
    $region3: #{tpu_custom_call.1} parent=1 // loop_header
      %s18 = sphi 0, %s22
      %p19 = scmp.ge.s32.totalorder %s18, 10
      %s25 = sphi 0, %s37
      %s26 = sphi 0, %s33
      %s27 = sphi 0, %s25
      %s28 = sphi 0, %s26
      %s29 = sphi 0, %s27
      %s30 = sphi 0, %s28
      %s40 = sphi 0, %s42
      %s43 = sphi 0, %s40
      %s44 = sphi 0, %s43
      %s60 = sphi 0, %s44
      %s68 = sphi 0, %s70
      %s71 = sphi 0, %s68
      %s72 = sphi 0, %s71
      %s88 = sphi 0, %s72
      %s94 = sphi 0, %s96
      %s97 = sphi 0, %s94
      %s98 = sphi 0, %s97
      %s114 = sphi 0, %s98
      %s120 = sphi 0, %s122
      %s123 = sphi 0, %s120
      %s124 = sphi 0, %s123
      %s140 = sphi 0, %s124
    $region4: #{tpu_custom_call.1} parent=1 // loop_header_branch
      %21 = sbr.rel (%p19) target = $region8
    $region5: #{tpu_custom_call.1} parent=1 // loop_body
      %s23 = ssub.s32 %s18, 1
      %s24 = ssub.s32 %s18, 2
      %s31 = sadd.s32 1, %s26
      %p32 = scmp.ge.s32.totalorder %s31, 4
      %s33 = scalar_select %p32, 0, %s31
      %s34 = sadd.s32 1, %s25
      %s35 = scalar_select %p32, %s34, %s25
      %p36 = scmp.ge.s32.totalorder %s35, 2
      %s37 = scalar_select %p36, 0, %s35
      %s38 = ssub.s32 %s26, %s33
      %p39 = scmp.eq.s32.totalorder %s38, 0
      %s41 = sadd.s32 %s40, 1
      %s42 = scalar_select %p39, %s40, %s41
      %p45 = pneg %p39
      %p46 = scmp.eq.s32.totalorder %s18, 7
      %p47 = por %p45, %p46
      %p48 = scmp.ne.s32.totalorder %s40, %s43
      %p49 = scmp.eq.s32.totalorder %s18, 0
      %p50 = por %p48, %p49
      %p51 = scmp.ne.s32.totalorder %s40, %s43
      %p52 = scmp.eq.s32.totalorder %s23, 7
      %p53 = por %p51, %p52
      %p54 = scmp.ne.s32.totalorder %s43, %s44
      %p55 = scmp.eq.s32.totalorder %s23, 0
      %p56 = por %p54, %p55
      %p57 = scmp.ne.s32.totalorder %s43, %s44
      %p58 = scmp.eq.s32.totalorder %s24, 7
      %p59 = por %p57, %p58
      %p61 = scmp.ne.s32.totalorder %s44, %s60
      %p62 = scmp.eq.s32.totalorder %s24, 0
      %p63 = por %p61, %p62
      %s64 = ssub.s32 %s26, %s33
      %s65 = ssub.s32 %s25, %s37
      %s66 = sor.u32 %s64, %s65
      %p67 = scmp.eq.s32.totalorder %s66, 0
      %s69 = sadd.s32 %s68, 1
      %s70 = scalar_select %p67, %s68, %s69
      %p73 = pneg %p67
      %p74 = scmp.eq.s32.totalorder %s18, 7
      %p75 = por %p73, %p74
      %p76 = scmp.ne.s32.totalorder %s68, %s71
      %p77 = scmp.eq.s32.totalorder %s18, 0
      %p78 = por %p76, %p77
      %p79 = scmp.ne.s32.totalorder %s68, %s71
      %p80 = scmp.eq.s32.totalorder %s23, 7
      %p81 = por %p79, %p80
      %p82 = scmp.ne.s32.totalorder %s71, %s72
      %p83 = scmp.eq.s32.totalorder %s23, 0
      %p84 = por %p82, %p83
      %p85 = scmp.ne.s32.totalorder %s71, %s72
      %p86 = scmp.eq.s32.totalorder %s24, 7
      %p87 = por %p85, %p86
      %p89 = scmp.ne.s32.totalorder %s72, %s88
      %p90 = scmp.eq.s32.totalorder %s24, 0
      %p91 = por %p89, %p90
      %s92 = ssub.s32 %s25, %s37
      %p93 = scmp.eq.s32.totalorder %s92, 0
      %s95 = sadd.s32 %s94, 1
      %s96 = scalar_select %p93, %s94, %s95
      %p99 = pneg %p93
      %p100 = scmp.eq.s32.totalorder %s18, 7
      %p101 = por %p99, %p100
      %p102 = scmp.ne.s32.totalorder %s94, %s97
      %p103 = scmp.eq.s32.totalorder %s18, 0
      %p104 = por %p102, %p103
      %p105 = scmp.ne.s32.totalorder %s94, %s97
      %p106 = scmp.eq.s32.totalorder %s23, 7
      %p107 = por %p105, %p106
      %p108 = scmp.ne.s32.totalorder %s97, %s98
      %p109 = scmp.eq.s32.totalorder %s23, 0
      %p110 = por %p108, %p109
      %p111 = scmp.ne.s32.totalorder %s97, %s98
      %p112 = scmp.eq.s32.totalorder %s24, 7
      %p113 = por %p111, %p112
      %p115 = scmp.ne.s32.totalorder %s98, %s114
      %p116 = scmp.eq.s32.totalorder %s24, 0
      %p117 = por %p115, %p116
      %s118 = ssub.s32 %s25, %s37
      %p119 = scmp.eq.s32.totalorder %s118, 0
      %s121 = sadd.s32 %s120, 1
      %s122 = scalar_select %p119, %s120, %s121
      %p125 = pneg %p119
      %p126 = scmp.eq.s32.totalorder %s18, 7
      %p127 = por %p125, %p126
      %p128 = scmp.ne.s32.totalorder %s120, %s123
      %p129 = scmp.eq.s32.totalorder %s18, 0
      %p130 = por %p128, %p129
      %p131 = scmp.ne.s32.totalorder %s120, %s123
      %p132 = scmp.eq.s32.totalorder %s23, 7
      %p133 = por %p131, %p132
      %p134 = scmp.ne.s32.totalorder %s123, %s124
      %p135 = scmp.eq.s32.totalorder %s23, 0
      %p136 = por %p134, %p135
      %p137 = scmp.ne.s32.totalorder %s123, %s124
      %p138 = scmp.eq.s32.totalorder %s24, 7
      %p139 = por %p137, %p138
      %p141 = scmp.ne.s32.totalorder %s124, %s140
      %p142 = scmp.eq.s32.totalorder %s24, 0
      %p143 = por %p141, %p142
      %p144 = scmp.le.s32.totalorder 1, %s18
      %p145 = scmp.lt.s32.totalorder %s18, 9
      %p146 = pnand %p144, %p145
      %p147 = pneg %p146
      // Predicated region
      $region9: #{tpu_custom_call.1} parent=5 // pred_check
        _
      $region10: #{tpu_custom_call.1} parent=5 // pred_check_branch
        %149 = sbr.rel (%p146) target = $region12
      $region11: #{tpu_custom_call.1} parent=5 // pred_region
        %s150 = ssub.s32 %s18, 1
      $region12: #{tpu_custom_call.1} parent=5 // pred_fallthru
        _
      %p151 = scmp.lt.s32.totalorder %s18, 8
      // Predicated region
      $region13: #{tpu_custom_call.1} parent=5 // pred_check
        %p152 = pneg %p151
      $region14: #{tpu_custom_call.1} parent=5 // pred_check_branch
        %154 = sbr.rel (%p152) target = $region16
      $region15: #{tpu_custom_call.1} parent=5 // pred_region
        // Predicated region
        $region17: #{tpu_custom_call.1} parent=15 // pred_check
          %p155 = pneg %p50
        $region18: #{tpu_custom_call.1} parent=15 // pred_check_branch
          %157 = sbr.rel (%p155) target = $region20
        $region19: #{tpu_custom_call.1} parent=15 // pred_region
          %s158 = sand.u32 %s40, 1
          %s159 = scalar_lea.sflag [#allocation4], %s158
          %s160 = sand.u32 %s40, 1
          %s161 = smul.addr %s160, 8
          %s162 = scalar_lea.vmem [#allocation3], %s161
          %s164 = ssub.s32 128, 128
          %165 = vsyncadd %s159, %s164
          %s166 = smul.addr %s26, 128
          %s167 = scalar_lea.hbm %s0, %s166
          %s169 = sshll.u32 %s162, 4
          %s170 = int_to_ptr.vmem [resolvable:$true] %s169
          %172 = dma.hbm_to_vmem [thread:$0]  %s167, 128, %s170, %s159
        $region20: #{tpu_custom_call.1} parent=15 // pred_fallthru
          _
        // Predicated region
        $region21: #{tpu_custom_call.1} parent=15 // pred_check
          %p173 = pneg %p78
        $region22: #{tpu_custom_call.1} parent=15 // pred_check_branch
          %175 = sbr.rel (%p173) target = $region24
        $region23: #{tpu_custom_call.1} parent=15 // pred_region
          %s176 = sand.u32 %s68, 1
          %s177 = scalar_lea.sflag [#allocation7], %s176
          %s178 = sand.u32 %s68, 1
          %s179 = smul.addr %s178, 64
          %s180 = scalar_lea.vmem [#allocation6], %s179
          %s181 = smul.u32 16, %s26
          %s183 = ssub.s32 1024, 1024
          %184 = vsyncadd %s177, %s183
          %s185 = smul.addr %s181, 2
          %s186 = sadd.s32 %s25, %s185
          %s187 = smul.addr %s186, 64
          %s188 = scalar_lea.hbm %s1, %s187
          %s189 = sshll.u32 %s180, 4
          %s190 = int_to_ptr.vmem [resolvable:$true] %s189
          %195 = dma.hbm_to_vmem [thread:$0]  %s188, 1024, %s190, %s177, 128, 64, 4
        $region24: #{tpu_custom_call.1} parent=15 // pred_fallthru
          _
        // Predicated region
        $region25: #{tpu_custom_call.1} parent=15 // pred_check
          %p196 = pneg %p104
        $region26: #{tpu_custom_call.1} parent=15 // pred_check_branch
          %198 = sbr.rel (%p196) target = $region28
        $region27: #{tpu_custom_call.1} parent=15 // pred_region
          %p199 = scmp.lt.s32.totalorder %s25, 1
          %s200 = scalar_select %p199, %s25, 1
          %s201 = scalar_lea.vmem %s2, %s200
        $region28: #{tpu_custom_call.1} parent=15 // pred_fallthru
          _
      $region16: #{tpu_custom_call.1} parent=5 // pred_fallthru
        _
      %p202 = scmp.le.s32.totalorder 1, %s18
      %p203 = scmp.lt.s32.totalorder %s18, 9
      %p204 = pnand %p202, %p203
      %p205 = pneg %p204
      // Predicated region
      $region29: #{tpu_custom_call.1} parent=5 // pred_check
        _
      $region30: #{tpu_custom_call.1} parent=5 // pred_check_branch
        %207 = sbr.rel (%p204) target = $region32
      $region31: #{tpu_custom_call.1} parent=5 // pred_region
        %s208 = ssub.s32 %s18, 1
        %s209 = sand.u32 %s43, 1
        %s210 = scalar_lea.sflag [#allocation4], %s209
        %s211 = sand.u32 %s43, 1
        %s212 = smul.addr %s211, 8
        %s213 = scalar_lea.vmem [#allocation3], %s212
        // Predicated region
        $region33: #{tpu_custom_call.1} parent=31 // pred_check
          %p214 = pneg %p56
        $region34: #{tpu_custom_call.1} parent=31 // pred_check_branch
          %216 = sbr.rel (%p214) target = $region36
        $region35: #{tpu_custom_call.1} parent=31 // pred_region
          %217 = dma.done %s210, 128
        $region36: #{tpu_custom_call.1} parent=31 // pred_fallthru
          _
        %s218 = sand.u32 %s71, 1
        %s219 = scalar_lea.sflag [#allocation7], %s218
        %s220 = sand.u32 %s71, 1
        %s221 = smul.addr %s220, 64
        %s222 = scalar_lea.vmem [#allocation6], %s221
        // Predicated region
        $region37: #{tpu_custom_call.1} parent=31 // pred_check
          %p223 = pneg %p84
        $region38: #{tpu_custom_call.1} parent=31 // pred_check_branch
          %225 = sbr.rel (%p223) target = $region40
        $region39: #{tpu_custom_call.1} parent=31 // pred_region
          %226 = dma.done %s219, 1024
        $region40: #{tpu_custom_call.1} parent=31 // pred_fallthru
          _
        %s227 = sand.u32 %s43, 1
        %s228 = scalar_lea.sflag [#allocation4], %s227
        %s229 = sand.u32 %s43, 1
        %s230 = smul.addr %s229, 8
        %s231 = scalar_lea.vmem [#allocation3], %s230
        %p232 = pneg %p56
        %p233 = pneg %p53
        %s234 = sand.u32 %s71, 1
        %s235 = scalar_lea.sflag [#allocation7], %s234
        %s236 = sand.u32 %s71, 1
        %s237 = smul.addr %s236, 64
        %s238 = scalar_lea.vmem [#allocation6], %s237
        %p239 = pneg %p84
        %p240 = pneg %p81
        %p241 = scmp.lt.s32.totalorder %s27, 1
        %s242 = scalar_select %p241, %s27, 1
        %s243 = scalar_lea.vmem %s2, %s242
        %p244 = pneg %p110
        %p245 = pneg %p107
        %p246 = pneg %p136
        %p247 = pneg %p133
        %s248 = sand.u32 %s123, 1
        %s249 = scalar_lea.sflag [#allocation5], %s248
        %s250 = sand.u32 %s123, 1
        %s251 = smul.addr %s250, 4
        %s252 = scalar_lea.vmem [#allocation8], %s251
        %s253 = smul.u32 16, %s28
        %p254 = scmp.lt.s32.totalorder %s27, 1
        %s255 = scalar_select %p254, %s27, 1
        %s256 = scalar_lea.vmem %s2, %s255
        %p258 = scmp.eq.s32.totalorder %s28, 0
        // Predicated region
        $region41: #{tpu_custom_call.1} parent=31 // pred_check
          %p259 = pneg %p258
        $region42: #{tpu_custom_call.1} parent=31 // pred_check_branch
          %261 = sbr.rel (%p259) target = $region44
        $region43: #{tpu_custom_call.1} parent=31 // pred_region
          %262 = vst [vmem:[#allocation2] sm:$0xff] 0.0
        $region44: #{tpu_custom_call.1} parent=31 // pred_fallthru
          _
        %v263 = vld [vmem:[#allocation2] sm:$0xff]
        %v264 = vld [vmem:[%s213] sm:$0xff]
        %v265 = vpack.c.bf16 %v264, %v264
        %v266 = vld [vmem:[%s222] sm:$0xf]
        %v267 = vld [vmem:[%s222 + $0x4] sm:$0xf]
        %v268 = vld [vmem:[%s222 + $0x8] sm:$0xf]
        %v269 = vld [vmem:[%s222 + $0xc] sm:$0xf]
        %v270 = vld [vmem:[%s222 + $0x10] sm:$0xf]
        %v271 = vld [vmem:[%s222 + $0x14] sm:$0xf]
        %v272 = vld [vmem:[%s222 + $0x18] sm:$0xf]
        %v273 = vld [vmem:[%s222 + $0x1c] sm:$0xf]
        %v274 = vld [vmem:[%s222 + $0x20] sm:$0xf]
        %v275 = vld [vmem:[%s222 + $0x24] sm:$0xf]
        %v276 = vld [vmem:[%s222 + $0x28] sm:$0xf]
        %v277 = vld [vmem:[%s222 + $0x2c] sm:$0xf]
        %v278 = vld [vmem:[%s222 + $0x30] sm:$0xf]
        %v279 = vld [vmem:[%s222 + $0x34] sm:$0xf]
        %v280 = vld [vmem:[%s222 + $0x38] sm:$0xf]
        %v281 = vld [vmem:[%s222 + $0x3c] sm:$0xf]
        %v298 = vunpack.c.l.b16 %v266
        %v299 = vunpack.c.l.b16 %v267
        %v300 = vunpack.c.l.b16 %v268
        %v301 = vunpack.c.l.b16 %v269
        %v302 = vunpack.c.l.b16 %v270
        %v303 = vunpack.c.l.b16 %v271
        %v304 = vunpack.c.l.b16 %v272
        %v305 = vunpack.c.l.b16 %v273
        %v306 = vunpack.c.l.b16 %v274
        %v307 = vunpack.c.l.b16 %v275
        %v308 = vunpack.c.l.b16 %v276
        %v309 = vunpack.c.l.b16 %v277
        %v310 = vunpack.c.l.b16 %v278
        %v311 = vunpack.c.l.b16 %v279
        %v312 = vunpack.c.l.b16 %v280
        %v313 = vunpack.c.l.b16 %v281
        %v314 = vpack.c.b16 %v299, %v298
        %v315 = vpack.c.b16 %v301, %v300
        %v316 = vpack.c.b16 %v303, %v302
        %v317 = vpack.c.b16 %v305, %v304
        %v318 = vpack.c.b16 %v307, %v306
        %v319 = vpack.c.b16 %v309, %v308
        %v320 = vpack.c.b16 %v311, %v310
        %v321 = vpack.c.b16 %v313, %v312
        %330 = vmatprep.subr.bf16.mxu0 0
        %331 = vmatpush1.bf16.msra.mxu0 %v321
        %332 = vmatprep.subr.bf16.mxu0 0
        %333 = vmatpush1.bf16.msra.mxu0 %v320
        %334 = vmatprep.subr.bf16.mxu0 0
        %335 = vmatpush1.bf16.msra.mxu0 %v319
        %336 = vmatprep.subr.bf16.mxu0 0
        %337 = vmatpush1.bf16.msra.mxu0 %v318
        %338 = vmatprep.subr.bf16.mxu0 0
        %339 = vmatpush1.bf16.msra.mxu0 %v317
        %340 = vmatprep.subr.bf16.mxu0 0
        %341 = vmatpush1.bf16.msra.mxu0 %v316
        %342 = vmatprep.subr.bf16.mxu0 0
        %343 = vmatpush1.bf16.msra.mxu0 %v315
        %344 = vmatprep.subr.bf16.mxu0 0
        %345 = vmatpush1.bf16.msra.mxu0 %v314
        %346 = vmatprep.subr.bf16.mxu0 0
        %347 = vmatpush2.bf16.msra.mxu0 0
        %348 = vmatprep.subr.bf16.mxu0 0
        %349 = vmatpush2.bf16.msra.mxu0 0
        %350 = vmatprep.subr.bf16.mxu0 0
        %351 = vmatpush2.bf16.msra.mxu0 0
        %352 = vmatprep.subr.bf16.mxu0 0
        %353 = vmatpush2.bf16.msra.mxu0 0
        %354 = vmatprep.subr.bf16.mxu0 0
        %355 = vmatpush2.bf16.msra.mxu0 0
        %356 = vmatprep.subr.bf16.mxu0 0
        %357 = vmatpush2.bf16.msra.mxu0 0
        %358 = vmatprep.subr.bf16.mxu0 0
        %359 = vmatpush2.bf16.msra.mxu0 0
        %360 = vmatprep.subr.bf16.mxu0 0
        %361 = vmatpush2.bf16.msra.mxu0 0
        %362 = vmatprep.mubr.bf16.mxu0 0
        %363 = vmatmul.mubr.bf16.gmra.mxu0 %v265
        %v364 = vpop.f32.mrf.mxu0
        %v365 = vadd.f32 0.0, %v364
        %v366 = vpop.f32.mrf.mxu0
        %v367 = vpop.f32.mrf.mxu0
        %v368 = vpop.f32.mrf.mxu0
        %369 = vdwg.mxu0
        %v370 = vadd.f32 %v263, %v365
        %371 = vst [vmem:[#allocation2] sm:$0xff] %v370
        %p372 = scmp.eq.s32.totalorder %s28, 3
        // Predicated region
        $region45: #{tpu_custom_call.1} parent=31 // pred_check
          %p373 = pneg %p372
        $region46: #{tpu_custom_call.1} parent=31 // pred_check_branch
          %375 = sbr.rel (%p373) target = $region48
        $region47: #{tpu_custom_call.1} parent=31 // pred_region
          %v376 = vld [vmem:[#allocation2] sm:$0xff]
          %v377 = vld [vmem:[%s256] sm:$0x1]
          %v379 = vlaneseq
          %v380 = vshrl.u32 %v379, 7
          %v381 = vsub.s32 0, %v380
          %v382 = vrot.slane %v377, %v381
          %v384 = vadd.f32 %v376, %v382
          %v385 = vmax.f32 %v384, 0.0
          %v386 = vpack.c.bf16 %v385, %v385
          %387 = vst [vmem:[%s252] sm:$0xf] %v386
        $region48: #{tpu_custom_call.1} parent=31 // pred_fallthru
          _
        %s388 = sand.u32 %s123, 1
        %s389 = scalar_lea.sflag [#allocation5], %s388
        %s390 = sand.u32 %s123, 1
        %s391 = smul.addr %s390, 4
        %s392 = scalar_lea.vmem [#allocation8], %s391
        // Predicated region
        $region49: #{tpu_custom_call.1} parent=31 // pred_check
          %p393 = pneg %p133
        $region50: #{tpu_custom_call.1} parent=31 // pred_check_branch
          %395 = sbr.rel (%p393) target = $region52
        $region51: #{tpu_custom_call.1} parent=31 // pred_region
          %s397 = ssub.s32 64, 64
          %398 = vsyncadd %s389, %s397
          %s399 = smul.addr %s27, 64
          %s400 = scalar_lea.hbm %s3, %s399
          %s402 = sshll.u32 %s392, 4
          %s403 = int_to_ptr.vmem [resolvable:$true] %s402
          %405 = dma.vmem_to_hbm [thread:$0]  %s403, 64, %s400, %s389
        $region52: #{tpu_custom_call.1} parent=31 // pred_fallthru
          _
      $region32: #{tpu_custom_call.1} parent=5 // pred_fallthru
        _
      %p406 = scmp.le.s32.totalorder 2, %s18
      // Predicated region
      $region53: #{tpu_custom_call.1} parent=5 // pred_check
        %p407 = pneg %p406
      $region54: #{tpu_custom_call.1} parent=5 // pred_check_branch
        %409 = sbr.rel (%p407) target = $region56
      $region55: #{tpu_custom_call.1} parent=5 // pred_region
        %s410 = ssub.s32 %s18, 2
        // Predicated region
        $region57: #{tpu_custom_call.1} parent=55 // pred_check
          %p411 = pneg %p139
        $region58: #{tpu_custom_call.1} parent=55 // pred_check_branch
          %413 = sbr.rel (%p411) target = $region60
        $region59: #{tpu_custom_call.1} parent=55 // pred_region
          %s414 = sand.u32 %s124, 1
          %s415 = scalar_lea.sflag [#allocation5], %s414
          %s416 = sand.u32 %s124, 1
          %s417 = smul.addr %s416, 4
          %s418 = scalar_lea.vmem [#allocation8], %s417
          %419 = dma.done %s415, 64
        $region60: #{tpu_custom_call.1} parent=55 // pred_fallthru
          _
      $region56: #{tpu_custom_call.1} parent=5 // pred_fallthru
        _
    $region6: #{tpu_custom_call.1} parent=1 // loop_footer
      %s22 = sadd.s32 1, %s18
    $region7: #{tpu_custom_call.1} parent=1 // loop_footer_branch
      %17 = sbr.rel target = $region3
    $region8: #{tpu_custom_call.1} parent=1 // loop_exit
      _
    %420 = vsyncpa [#allocation4], 1
    %s421 = scalar_lea.sflag [#allocation4], 1
    %422 = vsyncpa %s421, 1
    %423 = vsyncpa [#allocation7], 1
    %s424 = scalar_lea.sflag [#allocation7], 1
    %425 = vsyncpa %s424, 1
    %426 = vsyncpa [#allocation5], 1
    %s427 = scalar_lea.sflag [#allocation5], 1
    %428 = vsyncpa %s427, 1

</llo_original>
